<compile_context>
chip_gen: v7x
topology: tpu7x:2x2x1
jax: 0.10.0
libtpu: 0.0.40
codegen_flags: <defaults>
</compile_context>

<pallas_src>
import functools

import jax
import jax.numpy as jnp
from jax.experimental import pallas as pl
from jax.experimental.pallas import tpu as pltpu


def _tversky_partials_kernel(pred_ref, true_ref, out_ref,
                             acc_tp_ref, acc_t_ref, acc_p_ref,
                             *, use_sigmoid, hw_valid, tile):
    """Accumulates per-batch partial sums; writes them on the last HW tile.

    pred_ref / true_ref : (C, TILE) block of logits / targets (batch squeezed)
    out_ref             : (8, 128) per-batch partials; row0=sum(t*p),
                          row1=sum(t), row2=sum(p) (sigmoid path only)
    acc_*_ref           : (C, TILE) f32 running accumulators (VMEM scratch)
    """
    j = pl.program_id(1)
    n_tiles = pl.num_programs(1)

    @pl.when(j == 0)
    def _():
        acc_tp_ref[...] = jnp.zeros_like(acc_tp_ref)
        acc_t_ref[...] = jnp.zeros_like(acc_t_ref)
        if use_sigmoid:
            acc_p_ref[...] = jnp.zeros_like(acc_p_ref)

    logits = pred_ref[...].astype(jnp.float32)   # (C, TILE)
    t_raw = true_ref[...].astype(jnp.float32)    # (C, TILE)

    def accumulate(mask):
        if mask is not None:
            # Garbage may live in out-of-bounds lanes of a partial tile;
            # zero it *before* the exp so no NaN/Inf can propagate.
            x = jnp.where(mask, logits, 0.0)
            t = jnp.where(mask, t_raw, 0.0)
        else:
            x = logits
            t = t_raw
        if use_sigmoid:
            p = jax.nn.sigmoid(x)
        else:
            # Numerically stable softmax over the channel axis (torch dim=1).
            m = jnp.max(x, axis=0, keepdims=True)
            e = jnp.exp(x - m)
            p = e / jnp.sum(e, axis=0, keepdims=True)
        if mask is not None:
            p = jnp.where(mask, p, 0.0)
        # Elementwise-only accumulation (VPU); reductions deferred to finalize.
        acc_tp_ref[...] += t * p
        acc_t_ref[...] += t
        if use_sigmoid:
            acc_p_ref[...] += p

    if hw_valid % tile != 0:
        # Only the final tile has padding lanes; mask only there.
        @pl.when(j < n_tiles - 1)
        def _():
            accumulate(None)

        @pl.when(j == n_tiles - 1)
        def _():
            col = jax.lax.broadcasted_iota(jnp.int32, logits.shape, 1)
            accumulate((j * tile + col) < hw_valid)
    else:
        accumulate(None)

    @pl.when(j == n_tiles - 1)
    def _():
        tp = jnp.sum(acc_tp_ref[...])
        st = jnp.sum(acc_t_ref[...])
        if use_sigmoid:
            sp = jnp.sum(acc_p_ref[...])
        else:
            sp = jnp.float32(0.0)   # unused (softmax: sum(p) == #columns)
        row = jax.lax.broadcasted_iota(jnp.int32, out_ref.shape, 0)
        out_ref[...] = jnp.where(row == 0, tp,
                                 jnp.where(row == 1, st,
                                           jnp.where(row == 2, sp, 0.0)))


def tversky_loss_pallas(y_pred, y_true, alpha=0.5, beta=0.5, smooth=1e-06):
    assert y_pred.shape == y_true.shape, "y_pred and y_true must have the same shape"

    if y_pred.ndim > 1:
        # (N, C, *spatial) -> (N, C, HW): free, contiguous reshape (no transpose).
        N, C = int(y_pred.shape[0]), int(y_pred.shape[1])
        HW = 1
        for d in y_pred.shape[2:]:
            HW *= int(d)
        p3 = y_pred.reshape(N, C, HW)
        t3 = y_true.reshape(N, C, HW)
        use_sigmoid = False
    else:
        N, C = 1, 1
        HW = int(y_pred.shape[0])
        p3 = y_pred.reshape(1, 1, HW)
        t3 = y_true.reshape(1, 1, HW)
        use_sigmoid = True

    # Tile selection: as large as possible under a conservative VMEM budget
    # (2 inputs x 2 pipeline buffers x C x TILE x itemsize + 3 f32 accumulators),
    # capped at 32768 lanes and at the (128-padded) data extent.  ~8 MiB keeps
    # us safely under the scoped-VMEM defaults on v5e (16 MiB) and v7x (32 MiB).
    itemsize = jnp.dtype(p3.dtype).itemsize
    hw_pad = ((HW + 127) // 128) * 128
    per_lane_bytes = 2 * 2 * C * itemsize + 3 * C * 4
    max_tile = max(128, (8 * 1024 * 1024) // per_lane_bytes)
    TILE = min(hw_pad, 32768, max_tile)
    TILE = max(128, (TILE // 128) * 128)
    n_tiles = pl.cdiv(HW, TILE)

    kernel = functools.partial(
        _tversky_partials_kernel,
        use_sigmoid=use_sigmoid, hw_valid=int(HW), tile=int(TILE))

    partials = pl.pallas_call(
        kernel,
        out_shape=jax.ShapeDtypeStruct((N, 8, 128), jnp.float32),
        grid_spec=pltpu.PrefetchScalarGridSpec(
            num_scalar_prefetch=0,
            grid=(N, n_tiles),
            in_specs=[
                pl.BlockSpec((None, C, TILE), lambda n, j: (n, 0, j)),
                pl.BlockSpec((None, C, TILE), lambda n, j: (n, 0, j)),
            ],
            out_specs=pl.BlockSpec((None, 8, 128), lambda n, j: (n, 0, 0)),
            scratch_shapes=[
                pltpu.VMEM((C, TILE), jnp.float32),  # sum(t * p)
                pltpu.VMEM((C, TILE), jnp.float32),  # sum(t)
                pltpu.VMEM((C, TILE), jnp.float32),  # sum(p) (sigmoid path)
            ],
        ),
        compiler_params=pltpu.CompilerParams(
            dimension_semantics=("parallel", "arbitrary")),
    )(p3, t3)

    # Tiny epilogue: combine per-batch partials and apply the Tversky formula.
    tp = jnp.sum(partials[:, 0, 0])
    st = jnp.sum(partials[:, 1, 0])
    if use_sigmoid:
        sp = jnp.sum(partials[:, 2, 0])
    else:
        # softmax over channels: sum(p) over valid columns == #columns exactly.
        sp = jnp.float32(float(N * HW))
    fp = sp - tp          # sum((1 - t) * p)
    fn = st - tp          # sum(t * (1 - p))
    tversky_index = (tp + smooth) / (tp + alpha * fn + beta * fp + smooth)
    return 1.0 - tversky_index


def tversky_loss_ref(y_pred, y_true, alpha=0.5, beta=0.5, smooth=1e-06):
    """Pure-JAX reference mirroring the PyTorch module."""
    if y_pred.ndim > 1:
        p = jax.nn.softmax(y_pred, axis=1)
    else:
        p = jax.nn.sigmoid(y_pred)
    p = p.reshape(-1).astype(jnp.float32)
    t = y_true.reshape(-1).astype(jnp.float32)
    TP = jnp.sum(t * p)
    FP = jnp.sum((1.0 - t) * p)
    FN = jnp.sum(t * (1.0 - p))
    return 1.0 - (TP + smooth) / (TP + alpha * FN + beta * FP + smooth)


def _check(y_pred, y_true, name):
    out = jax.block_until_ready(tversky_loss_pallas(y_pred, y_true))
    ref = tversky_loss_ref(y_pred, y_true)
    if not jnp.allclose(out, ref, atol=1e-5, rtol=1e-5):
        raise AssertionError(f"{name} mismatch: pallas={out} ref={ref}")


if __name__ == "__main__":
    key = jax.random.PRNGKey(0)
    k1, k2, k3, k4, k5, k6 = jax.random.split(key, 6)

    # NCHW logits + binary targets (softmax path, HW multiple of tile).
    yp = jax.random.normal(k1, (2, 4, 16, 16), dtype=jnp.float32)
    yt = (jax.random.uniform(k2, (2, 4, 16, 16)) > 0.5).astype(jnp.float32)
    _check(yp, yt, "nchw")

    # Odd spatial size -> exercises the in-kernel last-tile mask (softmax path).
    yp2 = jax.random.normal(k3, (2, 3, 10, 17), dtype=jnp.float32)
    yt2 = (jax.random.uniform(k4, (2, 3, 10, 17)) > 0.5).astype(jnp.float32)
    _check(yp2, yt2, "nchw_masked")

    # 1-D logits -> sigmoid path (with masked partial tile).
    yp3 = jax.random.normal(k5, (300,), dtype=jnp.float32)
    yt3 = (jax.random.uniform(k6, (300,)) > 0.5).astype(jnp.float32)
    _check(yp3, yt3, "sigmoid_1d")

    print("KERNEL_OK")
</pallas_src>

<mosaic_0001>
module attributes {stable_mosaic.version = 11 : i64} {
  func.func @_tversky_partials_kernel(%arg0: i32, %arg1: i32, %arg2: memref<1x4x256xf32, #tpu.memory_space<vmem>>, %arg3: memref<1x4x256xf32, #tpu.memory_space<vmem>>, %arg4: memref<1x8x128xf32, #tpu.memory_space<vmem>>, %arg5: memref<4x256xf32, #tpu.memory_space<vmem>>, %arg6: memref<4x256xf32, #tpu.memory_space<vmem>>, %arg7: memref<4x256xf32, #tpu.memory_space<vmem>>) attributes {dimension_semantics = [#tpu.dimension_semantics<parallel>, #tpu.dimension_semantics<arbitrary>], iteration_bounds = array<i64: 2, 1>, scalar_prefetch = 0 : i64, scratch_operands = 3 : i64, tpu.core_type = #tpu.core_type<tc>, window_params = [{transform_indices = @transform_0, window_bounds = array<i64: 1, 4, 256>}, {transform_indices = @transform_1, window_bounds = array<i64: 1, 4, 256>}, {transform_indices = @transform_2, window_bounds = array<i64: 1, 8, 128>}]} {
    %c0_i32 = arith.constant 0 : i32
    %0 = arith.cmpi eq, %arg1, %c0_i32 : i32
    %1 = arith.extui %0 : i1 to i32
    %c0_i32_0 = arith.constant 0 : i32
    %2 = arith.cmpi ne, %1, %c0_i32_0 : i32
    scf.if %2 {
      %cst_17 = arith.constant 0.000000e+00 : f32
      %26 = vector.broadcast %cst_17 : f32 to vector<4x256xf32>
      %c0_18 = arith.constant 0 : index
      %c0_19 = arith.constant 0 : index
      %27 = vector.load %arg5[%c0_18, %c0_19] : memref<4x256xf32, #tpu.memory_space<vmem>>, vector<4x256xf32>
      tpu.vector_store %arg5[%c0_18, %c0_19], %26 {strides = array<i32>} : memref<4x256xf32, #tpu.memory_space<vmem>>, vector<4x256xf32>,
      %cst_20 = arith.constant 0.000000e+00 : f32
      %28 = vector.broadcast %cst_20 : f32 to vector<4x256xf32>
      %c0_21 = arith.constant 0 : index
      %c0_22 = arith.constant 0 : index
      %29 = vector.load %arg6[%c0_21, %c0_22] : memref<4x256xf32, #tpu.memory_space<vmem>>, vector<4x256xf32>
      tpu.vector_store %arg6[%c0_21, %c0_22], %28 {strides = array<i32>} : memref<4x256xf32, #tpu.memory_space<vmem>>, vector<4x256xf32>,
    } else {
    }
    %c0 = arith.constant 0 : index
    %c0_1 = arith.constant 0 : index
    %c0_2 = arith.constant 0 : index
    %3 = vector.load %arg2[%c0, %c0_1, %c0_2] : memref<1x4x256xf32, #tpu.memory_space<vmem>>, vector<1x4x256xf32>
    %4 = vector.shape_cast %3 : vector<1x4x256xf32> to vector<4x256xf32>
    %c0_3 = arith.constant 0 : index
    %c0_4 = arith.constant 0 : index
    %c0_5 = arith.constant 0 : index
    %5 = vector.load %arg3[%c0_3, %c0_4, %c0_5] : memref<1x4x256xf32, #tpu.memory_space<vmem>>, vector<1x4x256xf32>
    %6 = vector.shape_cast %5 : vector<1x4x256xf32> to vector<4x256xf32>
    %cst = arith.constant dense<0xFF800000> : vector<256xf32>
    %7 = vector.multi_reduction <maximumf>, %4, %cst [0] : vector<4x256xf32> to vector<256xf32>
    %8 = vector.shape_cast %7 : vector<256xf32> to vector<1x256xf32>
    %9 = vector.broadcast %8 : vector<1x256xf32> to vector<4x256xf32>
    %10 = arith.subf %4, %9 : vector<4x256xf32>
    %11 = math.exp %10 : vector<4x256xf32>
    %cst_6 = arith.constant dense<0.000000e+00> : vector<256xf32>
    %12 = vector.multi_reduction <add>, %11, %cst_6 [0] : vector<4x256xf32> to vector<256xf32>
    %13 = vector.shape_cast %12 : vector<256xf32> to vector<1x256xf32>
    %14 = vector.broadcast %13 : vector<1x256xf32> to vector<4x256xf32>
    %15 = arith.divf %11, %14 : vector<4x256xf32>
    %c0_7 = arith.constant 0 : index
    %c0_8 = arith.constant 0 : index
    %16 = vector.load %arg5[%c0_7, %c0_8] : memref<4x256xf32, #tpu.memory_space<vmem>>, vector<4x256xf32>
    %17 = arith.mulf %6, %15 : vector<4x256xf32>
    %18 = arith.addf %16, %17 : vector<4x256xf32>
    %c0_9 = arith.constant 0 : index
    %c0_10 = arith.constant 0 : index
    %19 = vector.load %arg5[%c0_9, %c0_10] : memref<4x256xf32, #tpu.memory_space<vmem>>, vector<4x256xf32>
    tpu.vector_store %arg5[%c0_9, %c0_10], %18 {strides = array<i32>} : memref<4x256xf32, #tpu.memory_space<vmem>>, vector<4x256xf32>,
    %c0_11 = arith.constant 0 : index
    %c0_12 = arith.constant 0 : index
    %20 = vector.load %arg6[%c0_11, %c0_12] : memref<4x256xf32, #tpu.memory_space<vmem>>, vector<4x256xf32>
    %21 = arith.addf %20, %6 : vector<4x256xf32>
    %c0_13 = arith.constant 0 : index
    %c0_14 = arith.constant 0 : index
    %22 = vector.load %arg6[%c0_13, %c0_14] : memref<4x256xf32, #tpu.memory_space<vmem>>, vector<4x256xf32>
    tpu.vector_store %arg6[%c0_13, %c0_14], %21 {strides = array<i32>} : memref<4x256xf32, #tpu.memory_space<vmem>>, vector<4x256xf32>,
    %c0_i32_15 = arith.constant 0 : i32
    %23 = arith.cmpi eq, %arg1, %c0_i32_15 : i32
    %24 = arith.extui %23 : i1 to i32
    %c0_i32_16 = arith.constant 0 : i32
    %25 = arith.cmpi ne, %24, %c0_i32_16 : i32
    scf.if %25 {
      %c0_17 = arith.constant 0 : index
      %c0_18 = arith.constant 0 : index
      %26 = vector.load %arg5[%c0_17, %c0_18] : memref<4x256xf32, #tpu.memory_space<vmem>>, vector<4x256xf32>
      %27 = vector.shape_cast %26 : vector<4x256xf32> to vector<1x4x256xf32>
      %cst_19 = arith.constant dense<0.000000e+00> : vector<1xf32>
      %28 = vector.multi_reduction <add>, %27, %cst_19 [1, 2] : vector<1x4x256xf32> to vector<1xf32>
      %29 = vector.shape_cast %28 : vector<1xf32> to vector<1x1x1xf32>
      %30 = vector.extract %29[0, 0, 0] : f32 from vector<1x1x1xf32>
      %c0_20 = arith.constant 0 : index
      %c0_21 = arith.constant 0 : index
      %31 = vector.load %arg6[%c0_20, %c0_21] : memref<4x256xf32, #tpu.memory_space<vmem>>, vector<4x256xf32>
      %32 = vector.shape_cast %31 : vector<4x256xf32> to vector<1x4x256xf32>
      %cst_22 = arith.constant dense<0.000000e+00> : vector<1xf32>
      %33 = vector.multi_reduction <add>, %32, %cst_22 [1, 2] : vector<1x4x256xf32> to vector<1xf32>
      %34 = vector.shape_cast %33 : vector<1xf32> to vector<1x1x1xf32>
      %35 = vector.extract %34[0, 0, 0] : f32 from vector<1x1x1xf32>
      %36 = tpu.iota {dimensions = array<i32: 0>} : vector<8x128xi32>
      %c0_i32_23 = arith.constant 0 : i32
      %37 = vector.broadcast %c0_i32_23 : i32 to vector<8x128xi32>
      %38 = arith.cmpi eq, %36, %37 : vector<8x128xi32>
      %c1_i32 = arith.constant 1 : i32
      %39 = vector.broadcast %c1_i32 : i32 to vector<8x128xi32>
      %40 = arith.cmpi eq, %36, %39 : vector<8x128xi32>
      %c2_i32 = arith.constant 2 : i32
      %41 = vector.broadcast %c2_i32 : i32 to vector<8x128xi32>
      %42 = arith.cmpi eq, %36, %41 : vector<8x128xi32>
      %cst_24 = arith.constant 0.000000e+00 : f32
      %cst_25 = arith.constant 0.000000e+00 : f32
      %43 = vector.broadcast %cst_24 : f32 to vector<8x128xf32>
      %44 = vector.broadcast %cst_25 : f32 to vector<8x128xf32>
      %45 = arith.select %42, %43, %44 : vector<8x128xi1>, vector<8x128xf32>
      %46 = vector.broadcast %35 : f32 to vector<8x128xf32>
      %47 = arith.select %40, %46, %45 : vector<8x128xi1>, vector<8x128xf32>
      %48 = vector.broadcast %30 : f32 to vector<8x128xf32>
      %49 = arith.select %38, %48, %47 : vector<8x128xi1>, vector<8x128xf32>
      %c0_26 = arith.constant 0 : index
      %c0_27 = arith.constant 0 : index
      %c0_28 = arith.constant 0 : index
      %50 = vector.load %arg4[%c0_26, %c0_27, %c0_28] : memref<1x8x128xf32, #tpu.memory_space<vmem>>, vector<1x8x128xf32>
      %51 = vector.shape_cast %50 : vector<1x8x128xf32> to vector<8x128xf32>
      %52 = vector.shape_cast %49 : vector<8x128xf32> to vector<1x8x128xf32>
      tpu.vector_store %arg4[%c0_26, %c0_27, %c0_28], %52 {strides = array<i32>} : memref<1x8x128xf32, #tpu.memory_space<vmem>>, vector<1x8x128xf32>,
    } else {
    }
    return
  }
  func.func @transform_0(%arg0: i32, %arg1: i32) -> (i32, i32, i32) {
    %c0_i32 = arith.constant 0 : i32
    %c0_i32_0 = arith.constant 0 : i32
    return %arg0, %c0_i32, %arg1 : i32, i32, i32
  }
  func.func @transform_1(%arg0: i32, %arg1: i32) -> (i32, i32, i32) {
    %c0_i32 = arith.constant 0 : i32
    %c0_i32_0 = arith.constant 0 : i32
    return %arg0, %c0_i32, %arg1 : i32, i32, i32
  }
  func.func @transform_2(%arg0: i32, %arg1: i32) -> (i32, i32, i32) {
    %c0_i32 = arith.constant 0 : i32
    %c0_i32_0 = arith.constant 0 : i32
    %c0_i32_1 = arith.constant 0 : i32
    return %arg0, %c0_i32, %c0_i32_0 : i32, i32, i32
  }
}

</mosaic_0001>

<llo_original>
// kernel: tpu_custom_call.1
$region0: #{tpu_custom_call.1}
  #allocation0 [shape = 'u32[]', space=smem, size = 0x4, offset = 0x4, fixed_abs, tag = 'smem constant byte address 0x4 - core index']
  #allocation1 [shape = 'u32[144,128]{1,0:T(1,128)}', space=vmem, size = 0x12000, scoped, tag = 'internal scratch']
  #allocation2 [shape = 'f32[4,256]{1,0:T(4,128)}', space=vmem, size = 0x1000, scoped, tag = 'scratch operand']
  #allocation3 [shape = 'f32[4,256]{1,0:T(4,128)}', space=vmem, size = 0x1000, scoped, tag = 'scratch operand']
  #allocation4 [shape = 'f32[4,256]{1,0:T(4,128)}', space=vmem, size = 0x1000, scoped, tag = 'scratch operand']
  %s0 = inlined_call_operand.hbm [shape: f32[2,4,256], index: 0, kind: input, shape index: {}]
  %s1 = inlined_call_operand.hbm [shape: f32[2,4,256], index: 1, kind: input, shape index: {}]
  %s2 = inlined_call_operand.hbm [shape: f32[2,8,128], index: 2, kind: output, shape index: {}]
  %s3 = sld [smem:[#allocation0]]
  $region57: #{tpu_custom_call.1} parent=0
    _
  %s5 = ssub.s32 1, %s3
  %s6 = scalar_select 0, %s5, %s3
  $region1: #{tpu_custom_call.1} parent=0
    #allocation5 [shape = 'u8[8192]{0}', space=vmem, size = 0x2000, scoped, tag = 'input window, operand 0']
    #allocation6 [shape = 's32[2]{0}', space=sflag, size = 0x8, scoped, tag = 'scoped memory for tpu_custom_call.1']
    #allocation7 [shape = 's32[2]{0}', space=sflag, size = 0x8, scoped, tag = 'scoped memory for tpu_custom_call.1']
    #allocation8 [shape = 'u8[8192]{0}', space=vmem, size = 0x2000, scoped, tag = 'input window, operand 1']
    #allocation9 [shape = 's32[2]{0}', space=sflag, size = 0x8, scoped, tag = 'scoped memory for tpu_custom_call.1']
    #allocation10 [shape = 'u8[8192]{0}', space=vmem, size = 0x2000, scoped, tag = 'output window, operand 0']
    %7 = vsyncpa [#allocation6], 0
    %s8 = scalar_lea.sflag [#allocation6], 1
    %9 = vsyncpa %s8, 0
    %10 = vsyncpa [#allocation9], 0
    %s11 = scalar_lea.sflag [#allocation9], 1
    %12 = vsyncpa %s11, 0
    %13 = vsyncpa [#allocation7], 0
    %s14 = scalar_lea.sflag [#allocation7], 1
    %15 = vsyncpa %s14, 0
    loop: start=0, step=1, limit=4
    $region2: #{tpu_custom_call.1} parent=1 // loop_pre_header
      _
    $region3: #{tpu_custom_call.1} parent=1 // loop_header
      %s17 = sphi 0, %s21
      %p18 = scmp.ge.s32.totalorder %s17, 4
      %s24 = sphi 0, %s36
      %s25 = sphi 0, %s32
      %s26 = sphi 0, %s24
      %s27 = sphi 0, %s25
      %s28 = sphi 0, %s26
      %s29 = sphi 0, %s27
      %s41 = sphi 0, %s43
      %s44 = sphi 0, %s41
      %s45 = sphi 0, %s44
      %s61 = sphi 0, %s45
      %s69 = sphi 0, %s71
      %s72 = sphi 0, %s69
      %s73 = sphi 0, %s72
      %s89 = sphi 0, %s73
      %s95 = sphi 0, %s97
      %s98 = sphi 0, %s95
      %s99 = sphi 0, %s98
      %s115 = sphi 0, %s99
    $region4: #{tpu_custom_call.1} parent=1 // loop_header_branch
      %20 = sbr.rel (%p18) target = $region8
    $region5: #{tpu_custom_call.1} parent=1 // loop_body
      %s22 = ssub.s32 %s17, 1
      %s23 = ssub.s32 %s17, 2
      %s30 = sadd.s32 1, %s25
      %p31 = scmp.ge.s32.totalorder %s30, 1
      %s32 = scalar_select %p31, 0, %s30
      %s33 = sadd.s32 1, %s24
      %s34 = scalar_select %p31, %s33, %s24
      %p35 = scmp.ge.s32.totalorder %s34, 2
      %s36 = scalar_select %p35, 0, %s34
      %s37 = ssub.s32 %s24, %s36
      %s38 = ssub.s32 %s25, %s32
      %s39 = sor.u32 %s37, %s38
      %p40 = scmp.eq.s32.totalorder %s39, 0
      %s42 = sadd.s32 %s41, 1
      %s43 = scalar_select %p40, %s41, %s42
      %p46 = pneg %p40
      %p47 = scmp.eq.s32.totalorder %s17, 1
      %p48 = por %p46, %p47
      %p49 = scmp.ne.s32.totalorder %s41, %s44
      %p50 = scmp.eq.s32.totalorder %s17, 0
      %p51 = por %p49, %p50
      %p52 = scmp.ne.s32.totalorder %s41, %s44
      %p53 = scmp.eq.s32.totalorder %s22, 1
      %p54 = por %p52, %p53
      %p55 = scmp.ne.s32.totalorder %s44, %s45
      %p56 = scmp.eq.s32.totalorder %s22, 0
      %p57 = por %p55, %p56
      %p58 = scmp.ne.s32.totalorder %s44, %s45
      %p59 = scmp.eq.s32.totalorder %s23, 1
      %p60 = por %p58, %p59
      %p62 = scmp.ne.s32.totalorder %s45, %s61
      %p63 = scmp.eq.s32.totalorder %s23, 0
      %p64 = por %p62, %p63
      %s65 = ssub.s32 %s24, %s36
      %s66 = ssub.s32 %s25, %s32
      %s67 = sor.u32 %s65, %s66
      %p68 = scmp.eq.s32.totalorder %s67, 0
      %s70 = sadd.s32 %s69, 1
      %s71 = scalar_select %p68, %s69, %s70
      %p74 = pneg %p68
      %p75 = scmp.eq.s32.totalorder %s17, 1
      %p76 = por %p74, %p75
      %p77 = scmp.ne.s32.totalorder %s69, %s72
      %p78 = scmp.eq.s32.totalorder %s17, 0
      %p79 = por %p77, %p78
      %p80 = scmp.ne.s32.totalorder %s69, %s72
      %p81 = scmp.eq.s32.totalorder %s22, 1
      %p82 = por %p80, %p81
      %p83 = scmp.ne.s32.totalorder %s72, %s73
      %p84 = scmp.eq.s32.totalorder %s22, 0
      %p85 = por %p83, %p84
      %p86 = scmp.ne.s32.totalorder %s72, %s73
      %p87 = scmp.eq.s32.totalorder %s23, 1
      %p88 = por %p86, %p87
      %p90 = scmp.ne.s32.totalorder %s73, %s89
      %p91 = scmp.eq.s32.totalorder %s23, 0
      %p92 = por %p90, %p91
      %s93 = ssub.s32 %s24, %s36
      %p94 = scmp.eq.s32.totalorder %s93, 0
      %s96 = sadd.s32 %s95, 1
      %s97 = scalar_select %p94, %s95, %s96
      %p100 = pneg %p94
      %p101 = scmp.eq.s32.totalorder %s17, 1
      %p102 = por %p100, %p101
      %p103 = scmp.ne.s32.totalorder %s95, %s98
      %p104 = scmp.eq.s32.totalorder %s17, 0
      %p105 = por %p103, %p104
      %p106 = scmp.ne.s32.totalorder %s95, %s98
      %p107 = scmp.eq.s32.totalorder %s22, 1
      %p108 = por %p106, %p107
      %p109 = scmp.ne.s32.totalorder %s98, %s99
      %p110 = scmp.eq.s32.totalorder %s22, 0
      %p111 = por %p109, %p110
      %p112 = scmp.ne.s32.totalorder %s98, %s99
      %p113 = scmp.eq.s32.totalorder %s23, 1
      %p114 = por %p112, %p113
      %p116 = scmp.ne.s32.totalorder %s99, %s115
      %p117 = scmp.eq.s32.totalorder %s23, 0
      %p118 = por %p116, %p117
      %p119 = scmp.le.s32.totalorder 1, %s17
      %p120 = scmp.lt.s32.totalorder %s17, 3
      %p121 = pnand %p119, %p120
      %p122 = pneg %p121
      // Predicated region
      $region9: #{tpu_custom_call.1} parent=5 // pred_check
        _
      $region10: #{tpu_custom_call.1} parent=5 // pred_check_branch
        %124 = sbr.rel (%p121) target = $region12
      $region11: #{tpu_custom_call.1} parent=5 // pred_region
        %s125 = ssub.s32 %s17, 1
      $region12: #{tpu_custom_call.1} parent=5 // pred_fallthru
        _
      %p126 = scmp.lt.s32.totalorder %s17, 2
      // Predicated region
      $region13: #{tpu_custom_call.1} parent=5 // pred_check
        %p127 = pneg %p126
      $region14: #{tpu_custom_call.1} parent=5 // pred_check_branch
        %129 = sbr.rel (%p127) target = $region16
      $region15: #{tpu_custom_call.1} parent=5 // pred_region
        // Predicated region
        $region17: #{tpu_custom_call.1} parent=15 // pred_check
          %p130 = pneg %p51
        $region18: #{tpu_custom_call.1} parent=15 // pred_check_branch
          %132 = sbr.rel (%p130) target = $region20
        $region19: #{tpu_custom_call.1} parent=15 // pred_region
          %s133 = sand.u32 %s41, 1
          %s134 = scalar_lea.sflag [#allocation6], %s133
          %s135 = sand.u32 %s41, 1
          %s136 = smul.addr %s135, 8
          %s137 = scalar_lea.vmem [#allocation5], %s136
          %s138 = smul.u32 2, %s25
          %s140 = ssub.s32 128, 128
          %141 = vsyncadd %s134, %s140
          %s142 = smul.addr %s24, 2
          %s143 = sadd.s32 %s138, %s142
          %s144 = smul.addr %s143, 64
          %s145 = scalar_lea.hbm %s0, %s144
          %s147 = sshll.u32 %s137, 4
          %s148 = int_to_ptr.vmem [resolvable:$true] %s147
          %150 = dma.hbm_to_vmem [thread:$0]  %s145, 128, %s148, %s134
        $region20: #{tpu_custom_call.1} parent=15 // pred_fallthru
          _
        // Predicated region
        $region21: #{tpu_custom_call.1} parent=15 // pred_check
          %p151 = pneg %p79
        $region22: #{tpu_custom_call.1} parent=15 // pred_check_branch
          %153 = sbr.rel (%p151) target = $region24
        $region23: #{tpu_custom_call.1} parent=15 // pred_region
          %s154 = sand.u32 %s69, 1
          %s155 = scalar_lea.sflag [#allocation9], %s154
          %s156 = sand.u32 %s69, 1
          %s157 = smul.addr %s156, 8
          %s158 = scalar_lea.vmem [#allocation8], %s157
          %s159 = smul.u32 2, %s25
          %s161 = ssub.s32 128, 128
          %162 = vsyncadd %s155, %s161
          %s163 = smul.addr %s24, 2
          %s164 = sadd.s32 %s159, %s163
          %s165 = smul.addr %s164, 64
          %s166 = scalar_lea.hbm %s1, %s165
          %s168 = sshll.u32 %s158, 4
          %s169 = int_to_ptr.vmem [resolvable:$true] %s168
          %171 = dma.hbm_to_vmem [thread:$0]  %s166, 128, %s169, %s155
        $region24: #{tpu_custom_call.1} parent=15 // pred_fallthru
          _
      $region16: #{tpu_custom_call.1} parent=5 // pred_fallthru
        _
      %p172 = scmp.le.s32.totalorder 1, %s17
      %p173 = scmp.lt.s32.totalorder %s17, 3
      %p174 = pnand %p172, %p173
      %p175 = pneg %p174
      // Predicated region
      $region25: #{tpu_custom_call.1} parent=5 // pred_check
        _
      $region26: #{tpu_custom_call.1} parent=5 // pred_check_branch
        %177 = sbr.rel (%p174) target = $region28
      $region27: #{tpu_custom_call.1} parent=5 // pred_region
        %s178 = ssub.s32 %s17, 1
        %s179 = sand.u32 %s44, 1
        %s180 = scalar_lea.sflag [#allocation6], %s179
        %s181 = sand.u32 %s44, 1
        %s182 = smul.addr %s181, 8
        %s183 = scalar_lea.vmem [#allocation5], %s182
        // Predicated region
        $region29: #{tpu_custom_call.1} parent=27 // pred_check
          %p184 = pneg %p57
        $region30: #{tpu_custom_call.1} parent=27 // pred_check_branch
          %186 = sbr.rel (%p184) target = $region32
        $region31: #{tpu_custom_call.1} parent=27 // pred_region
          %187 = dma.done %s180, 128
        $region32: #{tpu_custom_call.1} parent=27 // pred_fallthru
          _
        %s188 = sand.u32 %s72, 1
        %s189 = scalar_lea.sflag [#allocation9], %s188
        %s190 = sand.u32 %s72, 1
        %s191 = smul.addr %s190, 8
        %s192 = scalar_lea.vmem [#allocation8], %s191
        // Predicated region
        $region33: #{tpu_custom_call.1} parent=27 // pred_check
          %p193 = pneg %p85
        $region34: #{tpu_custom_call.1} parent=27 // pred_check_branch
          %195 = sbr.rel (%p193) target = $region36
        $region35: #{tpu_custom_call.1} parent=27 // pred_region
          %196 = dma.done %s189, 128
        $region36: #{tpu_custom_call.1} parent=27 // pred_fallthru
          _
        %s197 = sand.u32 %s44, 1
        %s198 = scalar_lea.sflag [#allocation6], %s197
        %s199 = sand.u32 %s44, 1
        %s200 = smul.addr %s199, 8
        %s201 = scalar_lea.vmem [#allocation5], %s200
        %p202 = pneg %p57
        %p203 = pneg %p54
        %s204 = sand.u32 %s72, 1
        %s205 = scalar_lea.sflag [#allocation9], %s204
        %s206 = sand.u32 %s72, 1
        %s207 = smul.addr %s206, 8
        %s208 = scalar_lea.vmem [#allocation8], %s207
        %p209 = pneg %p85
        %p210 = pneg %p82
        %p211 = pneg %p111
        %p212 = pneg %p108
        %s213 = sand.u32 %s98, 1
        %s214 = scalar_lea.sflag [#allocation7], %s213
        %s215 = sand.u32 %s98, 1
        %s216 = smul.addr %s215, 8
        %s217 = scalar_lea.vmem [#allocation10], %s216
        %s218 = smul.u32 2, %s27
        %s219 = smul.u32 2, %s27
        %p220 = scmp.eq.s32.totalorder %s27, 0
        // Predicated region
        $region37: #{tpu_custom_call.1} parent=27 // pred_check
          %p221 = pneg %p220
        $region38: #{tpu_custom_call.1} parent=27 // pred_check_branch
          %223 = sbr.rel (%p221) target = $region40
        $region39: #{tpu_custom_call.1} parent=27 // pred_region
          %224 = vst [vmem:[#allocation2] sm:$0xff] 0.0
          %225 = vst [vmem:[#allocation3] sm:$0xff] 0.0
        $region40: #{tpu_custom_call.1} parent=27 // pred_fallthru
          _
        %v226 = vld [vmem:[%s183] sm:$0xff]
        %v227 = vld [vmem:[%s192] sm:$0xff]
        %v229 = vcombine.high %v226, %v226
        %vm231 = vcmask 1043456
        %v232 = vsel %vm231, %v226, -inf
        %v233 = vrot.slane %v232, 4
        %v234 = vmax.f32 %v232, %v233
        %v235 = vrot.slane %v234, 2
        %v236 = vmax.f32 %v234, %v235
        %v237 = vrot.slane %v236, 1
        %v238 = vmax.f32 %v236, %v237
        %v239 = vsel %vm231, %v229, -inf
        %v240 = vrot.slane %v239, 4
        %v241 = vmax.f32 %v239, %v240
        %v242 = vrot.slane %v241, 2
        %v243 = vmax.f32 %v241, %v242
        %v244 = vrot.slane %v243, 1
        %v245 = vmax.f32 %v243, %v244
        %v248 = vcombine.low %v238, %v245
        %v250 = vsub.f32 %v226, %v248
        %v251 = vmul.f32 %v250, 1.442695
        %v252 = vpow.pop %v251
        %v254 = vcombine.high %v252, %v252
        %v256 = vsel %vm231, %v252, 0.0
        %v257 = vrot.slane %v256, 4
        %v258 = vadd.f32 %v256, %v257
        %v259 = vrot.slane %v258, 2
        %v260 = vadd.f32 %v258, %v259
        %v261 = vrot.slane %v260, 1
        %v262 = vadd.f32 %v260, %v261
        %v263 = vsel %vm231, %v254, 0.0
        %v264 = vrot.slane %v263, 4
        %v265 = vadd.f32 %v263, %v264
        %v266 = vrot.slane %v265, 2
        %v267 = vadd.f32 %v265, %v266
        %v268 = vrot.slane %v267, 1
        %v269 = vadd.f32 %v267, %v268
        %v272 = vcombine.low %v262, %v269
        %v274 = vrcp.pop %v272
        %v275 = vmul.f32 %v252, %v274
        %v276 = vld [vmem:[#allocation2] sm:$0xff]
        %v277 = vmul.f32 %v227, %v275
        %v278 = vadd.f32 %v276, %v277
        %279 = vst [vmem:[#allocation2] sm:$0xff] %v278
        %v280 = vld [vmem:[#allocation3] sm:$0xff]
        %v281 = vadd.f32 %v280, %v227
        %282 = vst [vmem:[#allocation3] sm:$0xff] %v281
        // Predicated region
        $region41: #{tpu_custom_call.1} parent=27 // pred_check
          %p283 = pneg %p220
        $region42: #{tpu_custom_call.1} parent=27 // pred_check_branch
          %285 = sbr.rel (%p283) target = $region44
        $region43: #{tpu_custom_call.1} parent=27 // pred_region
          %v286 = vld [vmem:[#allocation2] sm:$0xff]
          %v288 = vcombine.high %v286, %v286
          %v290 = vsel %vm231, %v286, 0.0
          %v291 = vsel %vm231, %v288, 0.0
          %v292 = vadd.f32 %v290, %v291
          %293 = vadd.xlane.f32.xlu0 %v292
          %v294 = vpop.xlane.xlu0 %293
          %v295 = vrot.slane %v294, 4
          %v296 = vadd.f32 %v294, %v295
          %v297 = vrot.slane %v296, 2
          %v298 = vadd.f32 %v296, %v297
          %v299 = vrot.slane %v298, 1
          %v300 = vadd.f32 %v298, %v299
          %s301 = vtos %v300
          %v302 = vld [vmem:[#allocation3] sm:$0xff]
          %v304 = vcombine.high %v302, %v302
          %v306 = vsel %vm231, %v302, 0.0
          %v307 = vsel %vm231, %v304, 0.0
          %v308 = vadd.f32 %v306, %v307
          %309 = vadd.xlane.f32.xlu0 %v308
          %v310 = vpop.xlane.xlu0 %309
          %v311 = vrot.slane %v310, 4
          %v312 = vadd.f32 %v310, %v311
          %v313 = vrot.slane %v312, 2
          %v314 = vadd.f32 %v312, %v313
          %v315 = vrot.slane %v314, 1
          %v316 = vadd.f32 %v314, %v315
          %s317 = vtos %v316
          %v318 = vlaneseq
          %v319 = vshrl.u32 %v318, 7
          %vm320 = vcmp.eq.s32.totalorder %v319, 0
          %vm321 = vcmp.eq.s32.totalorder %v319, 1
          %v322 = vstv %s317
          %v323 = vsel %vm321, %v322, 0.0
          %v324 = vstv %s301
          %v325 = vsel %vm320, %v324, %v323
          %326 = vst [vmem:[%s217] sm:$0xff] %v325
        $region44: #{tpu_custom_call.1} parent=27 // pred_fallthru
          _
        %s327 = sand.u32 %s98, 1
        %s328 = scalar_lea.sflag [#allocation7], %s327
        %s329 = sand.u32 %s98, 1
        %s330 = smul.addr %s329, 8
        %s331 = scalar_lea.vmem [#allocation10], %s330
        // Predicated region
        $region45: #{tpu_custom_call.1} parent=27 // pred_check
          %p332 = pneg %p108
        $region46: #{tpu_custom_call.1} parent=27 // pred_check_branch
          %334 = sbr.rel (%p332) target = $region48
        $region47: #{tpu_custom_call.1} parent=27 // pred_region
          %s336 = ssub.s32 128, 128
          %337 = vsyncadd %s328, %s336
          %s338 = smul.addr %s26, 128
          %s339 = scalar_lea.hbm %s2, %s338
          %s341 = sshll.u32 %s331, 4
          %s342 = int_to_ptr.vmem [resolvable:$true] %s341
          %344 = dma.vmem_to_hbm [thread:$0]  %s342, 128, %s339, %s328
        $region48: #{tpu_custom_call.1} parent=27 // pred_fallthru
          _
      $region28: #{tpu_custom_call.1} parent=5 // pred_fallthru
        _
      %p345 = scmp.le.s32.totalorder 2, %s17
      // Predicated region
      $region49: #{tpu_custom_call.1} parent=5 // pred_check
        %p346 = pneg %p345
      $region50: #{tpu_custom_call.1} parent=5 // pred_check_branch
        %348 = sbr.rel (%p346) target = $region52
      $region51: #{tpu_custom_call.1} parent=5 // pred_region
        %s349 = ssub.s32 %s17, 2
        // Predicated region
        $region53: #{tpu_custom_call.1} parent=51 // pred_check
          %p350 = pneg %p114
        $region54: #{tpu_custom_call.1} parent=51 // pred_check_branch
          %352 = sbr.rel (%p350) target = $region56
        $region55: #{tpu_custom_call.1} parent=51 // pred_region
          %s353 = sand.u32 %s99, 1
          %s354 = scalar_lea.sflag [#allocation7], %s353
          %s355 = sand.u32 %s99, 1
          %s356 = smul.addr %s355, 8
          %s357 = scalar_lea.vmem [#allocation10], %s356
          %358 = dma.done %s354, 128
        $region56: #{tpu_custom_call.1} parent=51 // pred_fallthru
          _
      $region52: #{tpu_custom_call.1} parent=5 // pred_fallthru
        _
    $region6: #{tpu_custom_call.1} parent=1 // loop_footer
      %s21 = sadd.s32 1, %s17
    $region7: #{tpu_custom_call.1} parent=1 // loop_footer_branch
      %16 = sbr.rel target = $region3
    $region8: #{tpu_custom_call.1} parent=1 // loop_exit
      _
    %359 = vsyncpa [#allocation6], 1
    %s360 = scalar_lea.sflag [#allocation6], 1
    %361 = vsyncpa %s360, 1
    %362 = vsyncpa [#allocation9], 1
    %s363 = scalar_lea.sflag [#allocation9], 1
    %364 = vsyncpa %s363, 1
    %365 = vsyncpa [#allocation7], 1
    %s366 = scalar_lea.sflag [#allocation7], 1
    %367 = vsyncpa %s366, 1

</llo_original>
